<compile_context>
chip_gen: v6e
topology: v6e:2x2x1
jax: 0.10.0
libtpu: 0.0.40
codegen_flags: <defaults>
</compile_context>

<pallas_src>
import functools

import numpy as np
import jax
import jax.numpy as jnp
from jax.experimental import pallas as pl
from jax.experimental.pallas import tpu as pltpu


def _round_up(v, m):
    return (v + m - 1) // m * m


def _rnn_kernel(x_ref, h0_ref, wx_ref, wh_ref, b_ref, wc_ref, bc_ref,
                out_ref, pre_ref, h_ref, *, length, chunk):
    """One (batch-tile, sequence-chunk) grid step.

    x_ref : (chunk, bt, d_k)       this chunk's inputs (matmul dtype)
    h0_ref: (bt, l_pad)            initial hidden state (f32)
    wx_ref: (d_k, l_pad)           input->hidden weight
    wh_ref: (l_pad, l_pad)         hidden->hidden weight
    b_ref : (1, l_pad)             recurrent bias (f32)
    wc_ref: (l_pad, c_pad)         classifier weight
    bc_ref: (1, c_pad)             classifier bias (f32)
    out_ref: (bt, c_pad)           logits (written at the last chunk only)
    pre_ref: (chunk, bt, l_pad)    VMEM scratch, f32: hoisted x-projection
    h_ref  : (bt, l_pad)           VMEM scratch, matmul dtype: carried hidden state
    """
    ci = pl.program_id(1)                      # sequence-chunk index (serial axis)
    n_chunks = pl.num_programs(1)
    bt = x_ref.shape[1]
    d_k = x_ref.shape[2]
    l_pad = wh_ref.shape[1]

    @pl.when(ci == 0)
    def _init():
        h_ref[...] = h0_ref[...].astype(h_ref.dtype)

    # Hoisted input projection: one GEMM for the whole chunk (off the serial
    # critical path), bias folded in.  f32 accumulation.
    x2 = x_ref[...].reshape(chunk * bt, d_k)
    pre = jnp.dot(x2, wx_ref[...], preferred_element_type=jnp.float32) + b_ref[...]
    pre_ref[...] = pre.reshape(chunk, bt, l_pad)

    needs_mask = (length % chunk) != 0         # static: only if length was padded

    def step(t, carry):
        acc = jnp.dot(h_ref[...], wh_ref[...], preferred_element_type=jnp.float32)
        h_new = jnp.tanh(pre_ref[t] + acc)
        if needs_mask:
            valid = (ci * chunk + t) < length
            h_new = jnp.where(valid, h_new, h_ref[...].astype(jnp.float32))
        h_ref[...] = h_new.astype(h_ref.dtype)
        return carry

    # chunk is small (<= chunk_len), so a full unroll is cheap and keeps LLO
    # scheduling visibility without blowing up code size for long sequences.
    jax.lax.fori_loop(0, chunk, step, 0, unroll=True)

    @pl.when(ci == n_chunks - 1)
    def _finalize():
        logits = (jnp.dot(h_ref[...], wc_ref[...],
                          preferred_element_type=jnp.float32) + bc_ref[...])
        out_ref[...] = logits.astype(out_ref.dtype)


def prepare_params(w_rb, b_rb, w_cls, b_cls, *, matmul_dtype=jnp.float32):
    """One-time parameter preprocessing (outside the per-call path).

    w_rb : (latent, input_size + latent)  PyTorch nn.Linear weight layout
    b_rb : (latent,)
    w_cls: (n_class, latent)
    b_cls: (n_class,)

    Splits the recurrent weight into Wx (d_k, l_pad) and Wh (l_pad, l_pad),
    transposed, zero-padded (lane dims to 128, x feature dim only to the
    sublane multiple).  Weights are cast to matmul_dtype (bf16 recommended on
    v6e/v7x); biases stay f32.
    """
    latent = w_rb.shape[0]
    input_size = w_rb.shape[1] - latent
    n_class = w_cls.shape[0]

    sublane = 16 if np.dtype(matmul_dtype) == np.dtype(jnp.bfloat16) else 8
    d_k = _round_up(input_size, sublane)       # NOT padded to 128 (contraction dim)
    l_pad = _round_up(latent, 128)
    c_pad = _round_up(n_class, 128)

    wx = jnp.zeros((d_k, l_pad), jnp.float32)
    wx = wx.at[:input_size, :latent].set(
        jnp.asarray(w_rb[:, :input_size], jnp.float32).T)
    wh = jnp.zeros((l_pad, l_pad), jnp.float32)
    wh = wh.at[:latent, :latent].set(
        jnp.asarray(w_rb[:, input_size:], jnp.float32).T)
    b = jnp.zeros((1, l_pad), jnp.float32).at[0, :latent].set(
        jnp.asarray(b_rb, jnp.float32))

    wc = jnp.zeros((l_pad, c_pad), jnp.float32).at[:latent, :n_class].set(
        jnp.asarray(w_cls, jnp.float32).T)
    bc = jnp.zeros((1, c_pad), jnp.float32).at[0, :n_class].set(
        jnp.asarray(b_cls, jnp.float32))

    wx = wx.astype(matmul_dtype)
    wh = wh.astype(matmul_dtype)
    wc = wc.astype(matmul_dtype)

    dims = dict(input_size=input_size, latent=latent, n_class=n_class,
                d_k=d_k, l_pad=l_pad, c_pad=c_pad, sublane=sublane)
    return (wx, wh, b, wc, bc), dims


def rnn_forward(x, h0, params, dims, *, chunk_len=8, batch_tile=None):
    """
    x:  (length, batch, input_size) float32
    h0: (batch, latent)             float32
    params, dims: from prepare_params()
    chunk_len:  sequence timesteps per grid step (streamed / double-buffered)
    batch_tile: rows per batch tile; >1 tile enables the "parallel" batch grid
                axis (2nd TensorCore on v7x).  Default: one tile.
    returns (batch, n_class) float32
    """
    wx, wh, b, wc, bc = params
    length, batch, input_size = x.shape
    assert input_size == dims["input_size"]
    d_k, l_pad, c_pad = dims["d_k"], dims["l_pad"], dims["c_pad"]
    sub = dims["sublane"]
    mdt = wx.dtype

    b_pad = _round_up(batch, sub)
    if batch_tile is None:
        bt = b_pad
    else:
        bt = _round_up(min(batch_tile, b_pad), sub)
        b_pad = _round_up(b_pad, bt)
    n_btiles = b_pad // bt

    chunk = max(1, min(chunk_len, length))
    l_seq_pad = _round_up(length, chunk)
    n_chunks = l_seq_pad // chunk

    # Pad activations only where needed: batch rows to the sublane multiple,
    # features to d_k (sublane multiple, NOT 128), length to a chunk multiple.
    x_p = jnp.zeros((l_seq_pad, b_pad, d_k), mdt)
    x_p = x_p.at[:length, :batch, :input_size].set(x.astype(mdt))
    h0_p = jnp.zeros((b_pad, l_pad), jnp.float32)
    h0_p = h0_p.at[:batch, :dims["latent"]].set(h0.astype(jnp.float32))

    # VMEM budget (double-buffered inputs + resident weights + scratch).
    isz = int(np.dtype(mdt).itemsize)
    vmem_needed = (
        2 * chunk * bt * d_k * isz                 # x chunk
        + 2 * bt * l_pad * 4                       # h0
        + 2 * (d_k + l_pad) * l_pad * isz          # Wx + Wh
        + 2 * l_pad * c_pad * isz                  # Wc
        + 2 * (l_pad + c_pad) * 4                  # biases
        + 2 * bt * c_pad * 4                       # out
        + chunk * bt * l_pad * 4                   # pre scratch
        + bt * l_pad * isz                         # h scratch
    )
    vmem_limit = min(max(32 * 1024 * 1024, int(vmem_needed * 1.25) + (1 << 20)),
                     128 * 1024 * 1024)            # on v7x physical VMEM is 64 MiB

    kernel = functools.partial(_rnn_kernel, length=length, chunk=chunk)

    grid_spec = pltpu.PrefetchScalarGridSpec(
        num_scalar_prefetch=0,
        grid=(n_btiles, n_chunks),                 # (parallel batch, serial seq)
        in_specs=[
            pl.BlockSpec((chunk, bt, d_k), lambda bi, ci: (ci, bi, 0)),   # x chunk
            pl.BlockSpec((bt, l_pad),      lambda bi, ci: (bi, 0)),       # h0
            pl.BlockSpec((d_k, l_pad),     lambda bi, ci: (0, 0)),        # Wx
            pl.BlockSpec((l_pad, l_pad),   lambda bi, ci: (0, 0)),        # Wh
            pl.BlockSpec((1, l_pad),       lambda bi, ci: (0, 0)),        # b
            pl.BlockSpec((l_pad, c_pad),   lambda bi, ci: (0, 0)),        # Wc
            pl.BlockSpec((1, c_pad),       lambda bi, ci: (0, 0)),        # bc
        ],
        out_specs=pl.BlockSpec((bt, c_pad), lambda bi, ci: (bi, 0)),
        scratch_shapes=[
            pltpu.VMEM((chunk, bt, l_pad), jnp.float32),   # pre-projection
            pltpu.VMEM((bt, l_pad), mdt),                  # carried hidden state
        ],
    )

    out_p = pl.pallas_call(
        kernel,
        out_shape=jax.ShapeDtypeStruct((b_pad, c_pad), jnp.float32),
        grid_spec=grid_spec,
        compiler_params=pltpu.CompilerParams(
            dimension_semantics=("parallel", "arbitrary"),
            vmem_limit_bytes=vmem_limit),
    )(x_p, h0_p, wx, wh, b, wc, bc)

    return out_p[:batch, :dims["n_class"]]


def rnn_forward_ref(x, h0, w_rb, b_rb, w_cls, b_cls):
    """Float64 numpy reference mirroring the PyTorch forward (double one_step)."""
    x = np.asarray(x, np.float64)
    h = np.asarray(h0, np.float64)
    w1 = np.asarray(w_rb, np.float64)
    b1 = np.asarray(b_rb, np.float64)
    w2 = np.asarray(w_cls, np.float64)
    b2 = np.asarray(b_cls, np.float64)
    for t in range(x.shape[0]):
        concat = np.concatenate([x[t], h], axis=1)
        h = np.tanh(concat @ w1.T + b1)
    return h @ w2.T + b2


if __name__ == "__main__":
    # Small shapes consistent with the module's forward.
    length, batch, input_size, latent, n_class = 10, 16, 16, 32, 8

    key = jax.random.PRNGKey(0)
    k_x, k_w1, k_b1, k_w2, k_b2 = jax.random.split(key, 5)

    x = jax.random.normal(k_x, (length, batch, input_size), dtype=jnp.float32)
    h0 = jnp.zeros((batch, latent), dtype=jnp.float32)   # default_ini_h

    # Deterministic parameters (shapes from the nn.Linear definitions).
    w_rb = jax.random.normal(k_w1, (latent, input_size + latent),
                             dtype=jnp.float32) * 0.1
    b_rb = jax.random.normal(k_b1, (latent,), dtype=jnp.float32) * 0.1
    w_cls = jax.random.normal(k_w2, (n_class, latent), dtype=jnp.float32) * 0.1
    b_cls = jax.random.normal(k_b2, (n_class,), dtype=jnp.float32) * 0.1

    ref = rnn_forward_ref(x, h0, w_rb, b_rb, w_cls, b_cls)

    # f32 MXU operands: tight check vs float64 reference. chunk_len=4 exercises
    # the sequence-chunked grid (3 chunks, last one partially masked) and
    # batch_tile=8 exercises the parallel batch-tile axis (2 tiles).
    params32, dims32 = prepare_params(w_rb, b_rb, w_cls, b_cls,
                                      matmul_dtype=jnp.float32)
    out32 = rnn_forward(x, h0, params32, dims32, chunk_len=4, batch_tile=8)
    out32 = jax.block_until_ready(out32)
    assert out32.shape == (batch, n_class)
    assert np.allclose(np.asarray(out32), ref, atol=5e-4, rtol=5e-4)

    # bf16 MXU operands (fast path on v6e/v7x): looser tolerance since the
    # error compounds over the sequence length.
    params16, dims16 = prepare_params(w_rb, b_rb, w_cls, b_cls,
                                      matmul_dtype=jnp.bfloat16)
    out16 = rnn_forward(x, h0, params16, dims16, chunk_len=4)
    out16 = jax.block_until_ready(out16)
    assert out16.shape == (batch, n_class)
    assert np.allclose(np.asarray(out16), ref, atol=6e-2, rtol=6e-2)

    print("KERNEL_OK")
</pallas_src>

<mosaic_0001>
module attributes {stable_mosaic.version = 11 : i64} {
  func.func @_rnn_kernel(%arg0: i32, %arg1: i32, %arg2: memref<4x8x16xf32, #tpu.memory_space<vmem>>, %arg3: memref<8x128xf32, #tpu.memory_space<vmem>>, %arg4: memref<16x128xf32, #tpu.memory_space<vmem>>, %arg5: memref<128x128xf32, #tpu.memory_space<vmem>>, %arg6: memref<1x128xf32, #tpu.memory_space<vmem>>, %arg7: memref<128x128xf32, #tpu.memory_space<vmem>>, %arg8: memref<1x128xf32, #tpu.memory_space<vmem>>, %arg9: memref<8x128xf32, #tpu.memory_space<vmem>>, %arg10: memref<4x8x128xf32, #tpu.memory_space<vmem>>, %arg11: memref<8x128xf32, #tpu.memory_space<vmem>>) attributes {dimension_semantics = [#tpu.dimension_semantics<parallel>, #tpu.dimension_semantics<arbitrary>], iteration_bounds = array<i64: 2, 3>, scalar_prefetch = 0 : i64, scratch_operands = 2 : i64, tpu.core_type = #tpu.core_type<tc>, window_params = [{transform_indices = @transform_0, window_bounds = array<i64: 4, 8, 16>}, {transform_indices = @transform_1, window_bounds = array<i64: 8, 128>}, {pipeline_mode = #tpu.pipeline_mode<synchronous>, transform_indices = @transform_2, window_bounds = array<i64: 16, 128>}, {pipeline_mode = #tpu.pipeline_mode<synchronous>, transform_indices = @transform_3, window_bounds = array<i64: 128, 128>}, {pipeline_mode = #tpu.pipeline_mode<synchronous>, transform_indices = @transform_4, window_bounds = array<i64: 1, 128>}, {pipeline_mode = #tpu.pipeline_mode<synchronous>, transform_indices = @transform_5, window_bounds = array<i64: 128, 128>}, {pipeline_mode = #tpu.pipeline_mode<synchronous>, transform_indices = @transform_6, window_bounds = array<i64: 1, 128>}, {transform_indices = @transform_7, window_bounds = array<i64: 8, 128>}]} {
    %c0_i32 = arith.constant 0 : i32
    %0 = arith.cmpi eq, %arg1, %c0_i32 : i32
    %1 = arith.extui %0 : i1 to i32
    %c0_i32_0 = arith.constant 0 : i32
    %2 = arith.cmpi ne, %1, %c0_i32_0 : i32
    scf.if %2 {
      %c0_64 = arith.constant 0 : index
      %c0_65 = arith.constant 0 : index
      %71 = vector.load %arg3[%c0_64, %c0_65] : memref<8x128xf32, #tpu.memory_space<vmem>>, vector<8x128xf32>
      %c0_66 = arith.constant 0 : index
      %c0_67 = arith.constant 0 : index
      %72 = vector.load %arg11[%c0_66, %c0_67] : memref<8x128xf32, #tpu.memory_space<vmem>>, vector<8x128xf32>
      tpu.vector_store %arg11[%c0_66, %c0_67], %71 {strides = array<i32>} : memref<8x128xf32, #tpu.memory_space<vmem>>, vector<8x128xf32>,
    } else {
    }
    %c0 = arith.constant 0 : index
    %c0_1 = arith.constant 0 : index
    %c0_2 = arith.constant 0 : index
    %3 = vector.load %arg2[%c0, %c0_1, %c0_2] : memref<4x8x16xf32, #tpu.memory_space<vmem>>, vector<4x8x16xf32>
    %4 = vector.shape_cast %3 : vector<4x8x16xf32> to vector<32x16xf32>
    %c0_3 = arith.constant 0 : index
    %c0_4 = arith.constant 0 : index
    %5 = vector.load %arg4[%c0_3, %c0_4] : memref<16x128xf32, #tpu.memory_space<vmem>>, vector<16x128xf32>
    %cst = arith.constant dense<0.000000e+00> : vector<32x128xf32>
    %6 = tpu.matmul %4, %5, %cst {dimension_numbers = #tpu.dot_dimension_numbers<[1], [0], [0], [1], [0, 0, 1, 1], [], []>} : vector<32x16xf32>, vector<16x128xf32>, vector<32x128xf32> -> vector<32x128xf32>
    %c0_5 = arith.constant 0 : index
    %c0_6 = arith.constant 0 : index
    %7 = vector.load %arg6[%c0_5, %c0_6] : memref<1x128xf32, #tpu.memory_space<vmem>>, vector<1x128xf32>
    %8 = vector.broadcast %7 : vector<1x128xf32> to vector<32x128xf32>
    %9 = arith.addf %6, %8 : vector<32x128xf32>
    %10 = vector.shape_cast %9 : vector<32x128xf32> to vector<4x8x128xf32>
    %c0_7 = arith.constant 0 : index
    %c0_8 = arith.constant 0 : index
    %c0_9 = arith.constant 0 : index
    %11 = vector.load %arg10[%c0_7, %c0_8, %c0_9] : memref<4x8x128xf32, #tpu.memory_space<vmem>>, vector<4x8x128xf32>
    tpu.vector_store %arg10[%c0_7, %c0_8, %c0_9], %10 {strides = array<i32>} : memref<4x8x128xf32, #tpu.memory_space<vmem>>, vector<4x8x128xf32>,
    %c0_i32_10 = arith.constant 0 : i32
    %c0_11 = arith.constant 0 : index
    %c0_12 = arith.constant 0 : index
    %12 = vector.load %arg11[%c0_11, %c0_12] : memref<8x128xf32, #tpu.memory_space<vmem>>, vector<8x128xf32>
    %c0_13 = arith.constant 0 : index
    %c0_14 = arith.constant 0 : index
    %13 = vector.load %arg5[%c0_13, %c0_14] : memref<128x128xf32, #tpu.memory_space<vmem>>, vector<128x128xf32>
    %cst_15 = arith.constant dense<0.000000e+00> : vector<8x128xf32>
    %14 = tpu.matmul %12, %13, %cst_15 {dimension_numbers = #tpu.dot_dimension_numbers<[1], [0], [0], [1], [0, 0, 1, 1], [], []>} : vector<8x128xf32>, vector<128x128xf32>, vector<8x128xf32> -> vector<8x128xf32>
    %15 = arith.index_cast %c0_i32_10 : i32 to index
    %c0_16 = arith.constant 0 : index
    %c0_17 = arith.constant 0 : index
    %16 = vector.load %arg10[%15, %c0_16, %c0_17] : memref<4x8x128xf32, #tpu.memory_space<vmem>>, vector<1x8x128xf32>
    %17 = vector.shape_cast %16 : vector<1x8x128xf32> to vector<8x128xf32>
    %18 = arith.addf %17, %14 : vector<8x128xf32>
    %19 = math.tanh %18 : vector<8x128xf32>
    %c4_i32 = arith.constant 4 : i32
    %20 = arith.muli %arg1, %c4_i32 : i32
    %21 = arith.addi %20, %c0_i32_10 : i32
    %c10_i32 = arith.constant 10 : i32
    %22 = arith.cmpi slt, %21, %c10_i32 : i32
    %c0_18 = arith.constant 0 : index
    %c0_19 = arith.constant 0 : index
    %23 = vector.load %arg11[%c0_18, %c0_19] : memref<8x128xf32, #tpu.memory_space<vmem>>, vector<8x128xf32>
    %24 = arith.select %22, %19, %23 : vector<8x128xf32>
    %c0_20 = arith.constant 0 : index
    %c0_21 = arith.constant 0 : index
    %25 = vector.load %arg11[%c0_20, %c0_21] : memref<8x128xf32, #tpu.memory_space<vmem>>, vector<8x128xf32>
    tpu.vector_store %arg11[%c0_20, %c0_21], %24 {strides = array<i32>} : memref<8x128xf32, #tpu.memory_space<vmem>>, vector<8x128xf32>,
    %c1_i32 = arith.constant 1 : i32
    %c0_22 = arith.constant 0 : index
    %c0_23 = arith.constant 0 : index
    %26 = vector.load %arg11[%c0_22, %c0_23] : memref<8x128xf32, #tpu.memory_space<vmem>>, vector<8x128xf32>
    %c0_24 = arith.constant 0 : index
    %c0_25 = arith.constant 0 : index
    %27 = vector.load %arg5[%c0_24, %c0_25] : memref<128x128xf32, #tpu.memory_space<vmem>>, vector<128x128xf32>
    %cst_26 = arith.constant dense<0.000000e+00> : vector<8x128xf32>
    %28 = tpu.matmul %26, %27, %cst_26 {dimension_numbers = #tpu.dot_dimension_numbers<[1], [0], [0], [1], [0, 0, 1, 1], [], []>} : vector<8x128xf32>, vector<128x128xf32>, vector<8x128xf32> -> vector<8x128xf32>
    %29 = arith.index_cast %c1_i32 : i32 to index
    %c0_27 = arith.constant 0 : index
    %c0_28 = arith.constant 0 : index
    %30 = vector.load %arg10[%29, %c0_27, %c0_28] : memref<4x8x128xf32, #tpu.memory_space<vmem>>, vector<1x8x128xf32>
    %31 = vector.shape_cast %30 : vector<1x8x128xf32> to vector<8x128xf32>
    %32 = arith.addf %31, %28 : vector<8x128xf32>
    %33 = math.tanh %32 : vector<8x128xf32>
    %c4_i32_29 = arith.constant 4 : i32
    %34 = arith.muli %arg1, %c4_i32_29 : i32
    %35 = arith.addi %34, %c1_i32 : i32
    %c10_i32_30 = arith.constant 10 : i32
    %36 = arith.cmpi slt, %35, %c10_i32_30 : i32
    %c0_31 = arith.constant 0 : index
    %c0_32 = arith.constant 0 : index
    %37 = vector.load %arg11[%c0_31, %c0_32] : memref<8x128xf32, #tpu.memory_space<vmem>>, vector<8x128xf32>
    %38 = arith.select %36, %33, %37 : vector<8x128xf32>
    %c0_33 = arith.constant 0 : index
    %c0_34 = arith.constant 0 : index
    %39 = vector.load %arg11[%c0_33, %c0_34] : memref<8x128xf32, #tpu.memory_space<vmem>>, vector<8x128xf32>
    tpu.vector_store %arg11[%c0_33, %c0_34], %38 {strides = array<i32>} : memref<8x128xf32, #tpu.memory_space<vmem>>, vector<8x128xf32>,
    %c2_i32 = arith.constant 2 : i32
    %c0_35 = arith.constant 0 : index
    %c0_36 = arith.constant 0 : index
    %40 = vector.load %arg11[%c0_35, %c0_36] : memref<8x128xf32, #tpu.memory_space<vmem>>, vector<8x128xf32>
    %c0_37 = arith.constant 0 : index
    %c0_38 = arith.constant 0 : index
    %41 = vector.load %arg5[%c0_37, %c0_38] : memref<128x128xf32, #tpu.memory_space<vmem>>, vector<128x128xf32>
    %cst_39 = arith.constant dense<0.000000e+00> : vector<8x128xf32>
    %42 = tpu.matmul %40, %41, %cst_39 {dimension_numbers = #tpu.dot_dimension_numbers<[1], [0], [0], [1], [0, 0, 1, 1], [], []>} : vector<8x128xf32>, vector<128x128xf32>, vector<8x128xf32> -> vector<8x128xf32>
    %43 = arith.index_cast %c2_i32 : i32 to index
    %c0_40 = arith.constant 0 : index
    %c0_41 = arith.constant 0 : index
    %44 = vector.load %arg10[%43, %c0_40, %c0_41] : memref<4x8x128xf32, #tpu.memory_space<vmem>>, vector<1x8x128xf32>
    %45 = vector.shape_cast %44 : vector<1x8x128xf32> to vector<8x128xf32>
    %46 = arith.addf %45, %42 : vector<8x128xf32>
    %47 = math.tanh %46 : vector<8x128xf32>
    %c4_i32_42 = arith.constant 4 : i32
    %48 = arith.muli %arg1, %c4_i32_42 : i32
    %49 = arith.addi %48, %c2_i32 : i32
    %c10_i32_43 = arith.constant 10 : i32
    %50 = arith.cmpi slt, %49, %c10_i32_43 : i32
    %c0_44 = arith.constant 0 : index
    %c0_45 = arith.constant 0 : index
    %51 = vector.load %arg11[%c0_44, %c0_45] : memref<8x128xf32, #tpu.memory_space<vmem>>, vector<8x128xf32>
    %52 = arith.select %50, %47, %51 : vector<8x128xf32>
    %c0_46 = arith.constant 0 : index
    %c0_47 = arith.constant 0 : index
    %53 = vector.load %arg11[%c0_46, %c0_47] : memref<8x128xf32, #tpu.memory_space<vmem>>, vector<8x128xf32>
    tpu.vector_store %arg11[%c0_46, %c0_47], %52 {strides = array<i32>} : memref<8x128xf32, #tpu.memory_space<vmem>>, vector<8x128xf32>,
    %c3_i32 = arith.constant 3 : i32
    %c0_48 = arith.constant 0 : index
    %c0_49 = arith.constant 0 : index
    %54 = vector.load %arg11[%c0_48, %c0_49] : memref<8x128xf32, #tpu.memory_space<vmem>>, vector<8x128xf32>
    %c0_50 = arith.constant 0 : index
    %c0_51 = arith.constant 0 : index
    %55 = vector.load %arg5[%c0_50, %c0_51] : memref<128x128xf32, #tpu.memory_space<vmem>>, vector<128x128xf32>
    %cst_52 = arith.constant dense<0.000000e+00> : vector<8x128xf32>
    %56 = tpu.matmul %54, %55, %cst_52 {dimension_numbers = #tpu.dot_dimension_numbers<[1], [0], [0], [1], [0, 0, 1, 1], [], []>} : vector<8x128xf32>, vector<128x128xf32>, vector<8x128xf32> -> vector<8x128xf32>
    %57 = arith.index_cast %c3_i32 : i32 to index
    %c0_53 = arith.constant 0 : index
    %c0_54 = arith.constant 0 : index
    %58 = vector.load %arg10[%57, %c0_53, %c0_54] : memref<4x8x128xf32, #tpu.memory_space<vmem>>, vector<1x8x128xf32>
    %59 = vector.shape_cast %58 : vector<1x8x128xf32> to vector<8x128xf32>
    %60 = arith.addf %59, %56 : vector<8x128xf32>
    %61 = math.tanh %60 : vector<8x128xf32>
    %c4_i32_55 = arith.constant 4 : i32
    %62 = arith.muli %arg1, %c4_i32_55 : i32
    %63 = arith.addi %62, %c3_i32 : i32
    %c10_i32_56 = arith.constant 10 : i32
    %64 = arith.cmpi slt, %63, %c10_i32_56 : i32
    %c0_57 = arith.constant 0 : index
    %c0_58 = arith.constant 0 : index
    %65 = vector.load %arg11[%c0_57, %c0_58] : memref<8x128xf32, #tpu.memory_space<vmem>>, vector<8x128xf32>
    %66 = arith.select %64, %61, %65 : vector<8x128xf32>
    %c0_59 = arith.constant 0 : index
    %c0_60 = arith.constant 0 : index
    %67 = vector.load %arg11[%c0_59, %c0_60] : memref<8x128xf32, #tpu.memory_space<vmem>>, vector<8x128xf32>
    tpu.vector_store %arg11[%c0_59, %c0_60], %66 {strides = array<i32>} : memref<8x128xf32, #tpu.memory_space<vmem>>, vector<8x128xf32>,
    %c4_i32_61 = arith.constant 4 : i32
    %c2_i32_62 = arith.constant 2 : i32
    %68 = arith.cmpi eq, %arg1, %c2_i32_62 : i32
    %69 = arith.extui %68 : i1 to i32
    %c0_i32_63 = arith.constant 0 : i32
    %70 = arith.cmpi ne, %69, %c0_i32_63 : i32
    scf.if %70 {
      %c0_64 = arith.constant 0 : index
      %c0_65 = arith.constant 0 : index
      %71 = vector.load %arg11[%c0_64, %c0_65] : memref<8x128xf32, #tpu.memory_space<vmem>>, vector<8x128xf32>
      %c0_66 = arith.constant 0 : index
      %c0_67 = arith.constant 0 : index
      %72 = vector.load %arg7[%c0_66, %c0_67] : memref<128x128xf32, #tpu.memory_space<vmem>>, vector<128x128xf32>
      %cst_68 = arith.constant dense<0.000000e+00> : vector<8x128xf32>
      %73 = tpu.matmul %71, %72, %cst_68 {dimension_numbers = #tpu.dot_dimension_numbers<[1], [0], [0], [1], [0, 0, 1, 1], [], []>} : vector<8x128xf32>, vector<128x128xf32>, vector<8x128xf32> -> vector<8x128xf32>
      %c0_69 = arith.constant 0 : index
      %c0_70 = arith.constant 0 : index
      %74 = vector.load %arg8[%c0_69, %c0_70] : memref<1x128xf32, #tpu.memory_space<vmem>>, vector<1x128xf32>
      %75 = vector.broadcast %74 : vector<1x128xf32> to vector<8x128xf32>
      %76 = arith.addf %73, %75 : vector<8x128xf32>
      %c0_71 = arith.constant 0 : index
      %c0_72 = arith.constant 0 : index
      %77 = vector.load %arg9[%c0_71, %c0_72] : memref<8x128xf32, #tpu.memory_space<vmem>>, vector<8x128xf32>
      tpu.vector_store %arg9[%c0_71, %c0_72], %76 {strides = array<i32>} : memref<8x128xf32, #tpu.memory_space<vmem>>, vector<8x128xf32>,
    } else {
    }
    return
  }
  func.func @transform_0(%arg0: i32, %arg1: i32) -> (i32, i32, i32) {
    %c0_i32 = arith.constant 0 : i32
    %c0_i32_0 = arith.constant 0 : i32
    return %arg1, %arg0, %c0_i32 : i32, i32, i32
  }
  func.func @transform_1(%arg0: i32, %arg1: i32) -> (i32, i32) {
    %c0_i32 = arith.constant 0 : i32
    %c0_i32_0 = arith.constant 0 : i32
    return %arg0, %c0_i32 : i32, i32
  }
  func.func @transform_2(%arg0: i32, %arg1: i32) -> (i32, i32) {
    %c0_i32 = arith.constant 0 : i32
    %c0_i32_0 = arith.constant 0 : i32
    %c0_i32_1 = arith.constant 0 : i32
    return %c0_i32, %c0_i32_0 : i32, i32
  }
  func.func @transform_3(%arg0: i32, %arg1: i32) -> (i32, i32) {
    %c0_i32 = arith.constant 0 : i32
    %c0_i32_0 = arith.constant 0 : i32
    %c0_i32_1 = arith.constant 0 : i32
    return %c0_i32, %c0_i32_0 : i32, i32
  }
  func.func @transform_4(%arg0: i32, %arg1: i32) -> (i32, i32) {
    %c0_i32 = arith.constant 0 : i32
    %c0_i32_0 = arith.constant 0 : i32
    %c0_i32_1 = arith.constant 0 : i32
    return %c0_i32, %c0_i32_0 : i32, i32
  }
  func.func @transform_5(%arg0: i32, %arg1: i32) -> (i32, i32) {
    %c0_i32 = arith.constant 0 : i32
    %c0_i32_0 = arith.constant 0 : i32
    %c0_i32_1 = arith.constant 0 : i32
    return %c0_i32, %c0_i32_0 : i32, i32
  }
  func.func @transform_6(%arg0: i32, %arg1: i32) -> (i32, i32) {
    %c0_i32 = arith.constant 0 : i32
    %c0_i32_0 = arith.constant 0 : i32
    %c0_i32_1 = arith.constant 0 : i32
    return %c0_i32, %c0_i32_0 : i32, i32
  }
  func.func @transform_7(%arg0: i32, %arg1: i32) -> (i32, i32) {
    %c0_i32 = arith.constant 0 : i32
    %c0_i32_0 = arith.constant 0 : i32
    return %arg0, %c0_i32 : i32, i32
  }
}

</mosaic_0001>

<llo_original>
// kernel: tpu_custom_call.1
$region0: #{tpu_custom_call.1}
  #allocation0 [shape = 'u32[]', space=smem, size = 0x4, offset = 0x4, fixed_abs, tag = 'smem constant byte address 0x4 - core index']
  #allocation1 [shape = 'u32[144,128]{1,0:T(1,128)}', space=vmem, size = 0x12000, scoped, tag = 'internal scratch']
  #allocation2 [shape = 'f32[4,8,128]{2,1,0:T(8,128)}', space=vmem, size = 0x4000, scoped, tag = 'scratch operand']
  #allocation3 [shape = 'f32[8,128]{1,0:T(8,128)}', space=vmem, size = 0x1000, scoped, tag = 'scratch operand']
  %s0 = inlined_call_operand.hbm [shape: f32[12,16,16], index: 0, kind: input, shape index: {}]
  %s1 = inlined_call_operand.hbm [shape: f32[16,128], index: 1, kind: input, shape index: {}]
  %s2 = inlined_call_operand.hbm [shape: f32[16,128], index: 2, kind: input, shape index: {}]
  %s3 = inlined_call_operand.hbm [shape: f32[128,128], index: 3, kind: input, shape index: {}]
  %s4 = inlined_call_operand.vmem [shape: f32[1,128], index: 4, kind: input, shape index: {}]
  %s5 = inlined_call_operand.hbm [shape: f32[128,128], index: 5, kind: input, shape index: {}]
  %s6 = inlined_call_operand.vmem [shape: f32[1,128], index: 6, kind: input, shape index: {}]
  %s7 = inlined_call_operand.hbm [shape: f32[16,128], index: 7, kind: output, shape index: {}]
  %s8 = sld [smem:[#allocation0]]
  $region89: #{tpu_custom_call.1} parent=0
    _
  %s10 = ssub.s32 1, %s8
  %s11 = scalar_select 0, %s10, %s8
  $region1: #{tpu_custom_call.1} parent=0
    #allocation4 [shape = 'u8[32768]{0}', space=vmem, size = 0x8000, scoped, tag = 'input window, operand 0']
    #allocation5 [shape = 's32[2]{0}', space=sflag, size = 0x8, scoped, tag = 'scoped memory for tpu_custom_call.1']
    #allocation6 [shape = 's32[2]{0}', space=sflag, size = 0x8, scoped, tag = 'scoped memory for tpu_custom_call.1']
    #allocation7 [shape = 'u8[8192]{0}', space=vmem, size = 0x2000, scoped, tag = 'input window, operand 1']
    #allocation8 [shape = 's32[2]{0}', space=sflag, size = 0x8, scoped, tag = 'scoped memory for tpu_custom_call.1']
    #allocation9 [shape = 'u8[8192]{0}', space=vmem, size = 0x2000, scoped, tag = 'input window, operand 2, single buffered']
    #allocation10 [shape = 'u8[65536]{0}', space=vmem, size = 0x10000, scoped, tag = 'input window, operand 3, single buffered']
    #allocation11 [shape = 's32[1]{0}', space=sflag, size = 0x4, scoped, tag = 'scoped memory for tpu_custom_call.1']
    #allocation12 [shape = 'u8[65536]{0}', space=vmem, size = 0x10000, scoped, tag = 'input window, operand 5, single buffered']
    #allocation13 [shape = 'u8[8192]{0}', space=vmem, size = 0x2000, scoped, tag = 'output window, operand 0']
    %12 = vsyncpa [#allocation5], 0
    %s13 = scalar_lea.sflag [#allocation5], 1
    %14 = vsyncpa %s13, 0
    %15 = vsyncpa [#allocation8], 0
    %s16 = scalar_lea.sflag [#allocation8], 1
    %17 = vsyncpa %s16, 0
    %18 = vsyncpa [#allocation11], 0
    %19 = vsyncpa [#allocation6], 0
    %s20 = scalar_lea.sflag [#allocation6], 1
    %21 = vsyncpa %s20, 0
    loop: start=0, step=1, limit=8
    $region2: #{tpu_custom_call.1} parent=1 // loop_pre_header
      _
    $region3: #{tpu_custom_call.1} parent=1 // loop_header
      %s23 = sphi 0, %s27
      %p24 = scmp.ge.s32.totalorder %s23, 8
      %s30 = sphi 0, %s42
      %s31 = sphi 0, %s38
      %s32 = sphi 0, %s30
      %s33 = sphi 0, %s31
      %s34 = sphi 0, %s32
      %s35 = sphi 0, %s33
      %s47 = sphi 0, %s49
      %s50 = sphi 0, %s47
      %s51 = sphi 0, %s50
      %s67 = sphi 0, %s51
      %s73 = sphi 0, %s75
      %s76 = sphi 0, %s73
      %s77 = sphi 0, %s76
      %s93 = sphi 0, %s77
      %s97 = sphi 0, %s97
      %s99 = sphi 0, %s97
      %s100 = sphi 0, %s99
      %s114 = sphi 0, %s100
      %s118 = sphi 0, %s118
      %s120 = sphi 0, %s118
      %s121 = sphi 0, %s120
      %s135 = sphi 0, %s121
      %s139 = sphi 0, %s139
      %s141 = sphi 0, %s139
      %s142 = sphi 0, %s141
      %s156 = sphi 0, %s142
      %s160 = sphi 0, %s160
      %s162 = sphi 0, %s160
      %s163 = sphi 0, %s162
      %s177 = sphi 0, %s163
      %s181 = sphi 0, %s181
      %s183 = sphi 0, %s181
      %s184 = sphi 0, %s183
      %s198 = sphi 0, %s184
      %s204 = sphi 0, %s206
      %s207 = sphi 0, %s204
      %s208 = sphi 0, %s207
      %s224 = sphi 0, %s208
    $region4: #{tpu_custom_call.1} parent=1 // loop_header_branch
      %26 = sbr.rel (%p24) target = $region8
    $region5: #{tpu_custom_call.1} parent=1 // loop_body
      %s28 = ssub.s32 %s23, 1
      %s29 = ssub.s32 %s23, 2
      %s36 = sadd.s32 1, %s31
      %p37 = scmp.ge.s32.totalorder %s36, 3
      %s38 = scalar_select %p37, 0, %s36
      %s39 = sadd.s32 1, %s30
      %s40 = scalar_select %p37, %s39, %s30
      %p41 = scmp.ge.s32.totalorder %s40, 2
      %s42 = scalar_select %p41, 0, %s40
      %s43 = ssub.s32 %s31, %s38
      %s44 = ssub.s32 %s30, %s42
      %s45 = sor.u32 %s43, %s44
      %p46 = scmp.eq.s32.totalorder %s45, 0
      %s48 = sadd.s32 %s47, 1
      %s49 = scalar_select %p46, %s47, %s48
      %p52 = pneg %p46
      %p53 = scmp.eq.s32.totalorder %s23, 5
      %p54 = por %p52, %p53
      %p55 = scmp.ne.s32.totalorder %s47, %s50
      %p56 = scmp.eq.s32.totalorder %s23, 0
      %p57 = por %p55, %p56
      %p58 = scmp.ne.s32.totalorder %s47, %s50
      %p59 = scmp.eq.s32.totalorder %s28, 5
      %p60 = por %p58, %p59
      %p61 = scmp.ne.s32.totalorder %s50, %s51
      %p62 = scmp.eq.s32.totalorder %s28, 0
      %p63 = por %p61, %p62
      %p64 = scmp.ne.s32.totalorder %s50, %s51
      %p65 = scmp.eq.s32.totalorder %s29, 5
      %p66 = por %p64, %p65
      %p68 = scmp.ne.s32.totalorder %s51, %s67
      %p69 = scmp.eq.s32.totalorder %s29, 0
      %p70 = por %p68, %p69
      %s71 = ssub.s32 %s30, %s42
      %p72 = scmp.eq.s32.totalorder %s71, 0
      %s74 = sadd.s32 %s73, 1
      %s75 = scalar_select %p72, %s73, %s74
      %p78 = pneg %p72
      %p79 = scmp.eq.s32.totalorder %s23, 5
      %p80 = por %p78, %p79
      %p81 = scmp.ne.s32.totalorder %s73, %s76
      %p82 = scmp.eq.s32.totalorder %s23, 0
      %p83 = por %p81, %p82
      %p84 = scmp.ne.s32.totalorder %s73, %s76
      %p85 = scmp.eq.s32.totalorder %s28, 5
      %p86 = por %p84, %p85
      %p87 = scmp.ne.s32.totalorder %s76, %s77
      %p88 = scmp.eq.s32.totalorder %s28, 0
      %p89 = por %p87, %p88
      %p90 = scmp.ne.s32.totalorder %s76, %s77
      %p91 = scmp.eq.s32.totalorder %s29, 5
      %p92 = por %p90, %p91
      %p94 = scmp.ne.s32.totalorder %s77, %s93
      %p95 = scmp.eq.s32.totalorder %s29, 0
      %p96 = por %p94, %p95
      %s98 = sadd.s32 %s97, 1
      %p101 = scmp.eq.s32.totalorder %s23, 5
      %p102 = scmp.ne.s32.totalorder %s97, %s99
      %p103 = scmp.eq.s32.totalorder %s23, 0
      %p104 = por %p102, %p103
      %p105 = scmp.ne.s32.totalorder %s97, %s99
      %p106 = scmp.eq.s32.totalorder %s28, 5
      %p107 = por %p105, %p106
      %p108 = scmp.ne.s32.totalorder %s99, %s100
      %p109 = scmp.eq.s32.totalorder %s28, 0
      %p110 = por %p108, %p109
      %p111 = scmp.ne.s32.totalorder %s99, %s100
      %p112 = scmp.eq.s32.totalorder %s29, 5
      %p113 = por %p111, %p112
      %p115 = scmp.ne.s32.totalorder %s100, %s114
      %p116 = scmp.eq.s32.totalorder %s29, 0
      %p117 = por %p115, %p116
      %s119 = sadd.s32 %s118, 1
      %p122 = scmp.eq.s32.totalorder %s23, 5
      %p123 = scmp.ne.s32.totalorder %s118, %s120
      %p124 = scmp.eq.s32.totalorder %s23, 0
      %p125 = por %p123, %p124
      %p126 = scmp.ne.s32.totalorder %s118, %s120
      %p127 = scmp.eq.s32.totalorder %s28, 5
      %p128 = por %p126, %p127
      %p129 = scmp.ne.s32.totalorder %s120, %s121
      %p130 = scmp.eq.s32.totalorder %s28, 0
      %p131 = por %p129, %p130
      %p132 = scmp.ne.s32.totalorder %s120, %s121
      %p133 = scmp.eq.s32.totalorder %s29, 5
      %p134 = por %p132, %p133
      %p136 = scmp.ne.s32.totalorder %s121, %s135
      %p137 = scmp.eq.s32.totalorder %s29, 0
      %p138 = por %p136, %p137
      %s140 = sadd.s32 %s139, 1
      %p143 = scmp.eq.s32.totalorder %s23, 5
      %p144 = scmp.ne.s32.totalorder %s139, %s141
      %p145 = scmp.eq.s32.totalorder %s23, 0
      %p146 = por %p144, %p145
      %p147 = scmp.ne.s32.totalorder %s139, %s141
      %p148 = scmp.eq.s32.totalorder %s28, 5
      %p149 = por %p147, %p148
      %p150 = scmp.ne.s32.totalorder %s141, %s142
      %p151 = scmp.eq.s32.totalorder %s28, 0
      %p152 = por %p150, %p151
      %p153 = scmp.ne.s32.totalorder %s141, %s142
      %p154 = scmp.eq.s32.totalorder %s29, 5
      %p155 = por %p153, %p154
      %p157 = scmp.ne.s32.totalorder %s142, %s156
      %p158 = scmp.eq.s32.totalorder %s29, 0
      %p159 = por %p157, %p158
      %s161 = sadd.s32 %s160, 1
      %p164 = scmp.eq.s32.totalorder %s23, 5
      %p165 = scmp.ne.s32.totalorder %s160, %s162
      %p166 = scmp.eq.s32.totalorder %s23, 0
      %p167 = por %p165, %p166
      %p168 = scmp.ne.s32.totalorder %s160, %s162
      %p169 = scmp.eq.s32.totalorder %s28, 5
      %p170 = por %p168, %p169
      %p171 = scmp.ne.s32.totalorder %s162, %s163
      %p172 = scmp.eq.s32.totalorder %s28, 0
      %p173 = por %p171, %p172
      %p174 = scmp.ne.s32.totalorder %s162, %s163
      %p175 = scmp.eq.s32.totalorder %s29, 5
      %p176 = por %p174, %p175
      %p178 = scmp.ne.s32.totalorder %s163, %s177
      %p179 = scmp.eq.s32.totalorder %s29, 0
      %p180 = por %p178, %p179
      %s182 = sadd.s32 %s181, 1
      %p185 = scmp.eq.s32.totalorder %s23, 5
      %p186 = scmp.ne.s32.totalorder %s181, %s183
      %p187 = scmp.eq.s32.totalorder %s23, 0
      %p188 = por %p186, %p187
      %p189 = scmp.ne.s32.totalorder %s181, %s183
      %p190 = scmp.eq.s32.totalorder %s28, 5
      %p191 = por %p189, %p190
      %p192 = scmp.ne.s32.totalorder %s183, %s184
      %p193 = scmp.eq.s32.totalorder %s28, 0
      %p194 = por %p192, %p193
      %p195 = scmp.ne.s32.totalorder %s183, %s184
      %p196 = scmp.eq.s32.totalorder %s29, 5
      %p197 = por %p195, %p196
      %p199 = scmp.ne.s32.totalorder %s184, %s198
      %p200 = scmp.eq.s32.totalorder %s29, 0
      %p201 = por %p199, %p200
      %s202 = ssub.s32 %s30, %s42
      %p203 = scmp.eq.s32.totalorder %s202, 0
      %s205 = sadd.s32 %s204, 1
      %s206 = scalar_select %p203, %s204, %s205
      %p209 = pneg %p203
      %p210 = scmp.eq.s32.totalorder %s23, 5
      %p211 = por %p209, %p210
      %p212 = scmp.ne.s32.totalorder %s204, %s207
      %p213 = scmp.eq.s32.totalorder %s23, 0
      %p214 = por %p212, %p213
      %p215 = scmp.ne.s32.totalorder %s204, %s207
      %p216 = scmp.eq.s32.totalorder %s28, 5
      %p217 = por %p215, %p216
      %p218 = scmp.ne.s32.totalorder %s207, %s208
      %p219 = scmp.eq.s32.totalorder %s28, 0
      %p220 = por %p218, %p219
      %p221 = scmp.ne.s32.totalorder %s207, %s208
      %p222 = scmp.eq.s32.totalorder %s29, 5
      %p223 = por %p221, %p222
      %p225 = scmp.ne.s32.totalorder %s208, %s224
      %p226 = scmp.eq.s32.totalorder %s29, 0
      %p227 = por %p225, %p226
      %p228 = scmp.le.s32.totalorder 1, %s23
      %p229 = scmp.lt.s32.totalorder %s23, 7
      %p230 = pnand %p228, %p229
      %p231 = pneg %p230
      // Predicated region
      $region9: #{tpu_custom_call.1} parent=5 // pred_check
        _
      $region10: #{tpu_custom_call.1} parent=5 // pred_check_branch
        %233 = sbr.rel (%p230) target = $region12
      $region11: #{tpu_custom_call.1} parent=5 // pred_region
        %s234 = ssub.s32 %s23, 1
        // Predicated region
        $region13: #{tpu_custom_call.1} parent=11 // pred_check
          %p235 = pneg %p110
        $region14: #{tpu_custom_call.1} parent=11 // pred_check_branch
          %237 = sbr.rel (%p235) target = $region16
        $region15: #{tpu_custom_call.1} parent=11 // pred_region
          %s239 = ssub.s32 256, 256
          %240 = vsyncadd [#allocation8], %s239
          %s241 = sshll.u32 [#allocation9], 4
          %s242 = int_to_ptr.vmem [resolvable:$true] %s241
          %247 = dma.hbm_to_vmem [thread:$0]  %s2, 256, %s242, [#allocation8], 128, 128, 8
        $region16: #{tpu_custom_call.1} parent=11 // pred_fallthru
          _
        // Predicated region
        $region17: #{tpu_custom_call.1} parent=11 // pred_check
          %p248 = pneg %p131
        $region18: #{tpu_custom_call.1} parent=11 // pred_check_branch
          %250 = sbr.rel (%p248) target = $region20
        $region19: #{tpu_custom_call.1} parent=11 // pred_region
          %s252 = ssub.s32 2048, 2048
          %253 = vsyncadd [#allocation11], %s252
          %s254 = sshll.u32 [#allocation10], 4
          %s255 = int_to_ptr.vmem [resolvable:$true] %s254
          %260 = dma.hbm_to_vmem [thread:$0]  %s3, 2048, %s255, [#allocation11], 128, 128, 8
        $region20: #{tpu_custom_call.1} parent=11 // pred_fallthru
          _
        // Predicated region
        $region21: #{tpu_custom_call.1} parent=11 // pred_check
          %p261 = pneg %p152
        $region22: #{tpu_custom_call.1} parent=11 // pred_check_branch
          %263 = sbr.rel (%p261) target = $region24
        $region23: #{tpu_custom_call.1} parent=11 // pred_region
          _
        $region24: #{tpu_custom_call.1} parent=11 // pred_fallthru
          _
        // Predicated region
        $region25: #{tpu_custom_call.1} parent=11 // pred_check
          %p264 = pneg %p173
        $region26: #{tpu_custom_call.1} parent=11 // pred_check_branch
          %266 = sbr.rel (%p264) target = $region28
        $region27: #{tpu_custom_call.1} parent=11 // pred_region
          %s268 = ssub.s32 2048, 2048
          %269 = vsyncadd [#allocation11], %s268
          %s270 = sshll.u32 [#allocation12], 4
          %s271 = int_to_ptr.vmem [resolvable:$true] %s270
          %276 = dma.hbm_to_vmem [thread:$0]  %s5, 2048, %s271, [#allocation11], 128, 128, 8
        $region28: #{tpu_custom_call.1} parent=11 // pred_fallthru
          _
        // Predicated region
        $region29: #{tpu_custom_call.1} parent=11 // pred_check
          %p277 = pneg %p194
        $region30: #{tpu_custom_call.1} parent=11 // pred_check_branch
          %279 = sbr.rel (%p277) target = $region32
        $region31: #{tpu_custom_call.1} parent=11 // pred_region
          _
        $region32: #{tpu_custom_call.1} parent=11 // pred_fallthru
          _
      $region12: #{tpu_custom_call.1} parent=5 // pred_fallthru
        _
      %p280 = scmp.lt.s32.totalorder %s23, 6
      // Predicated region
      $region33: #{tpu_custom_call.1} parent=5 // pred_check
        %p281 = pneg %p280
      $region34: #{tpu_custom_call.1} parent=5 // pred_check_branch
        %283 = sbr.rel (%p281) target = $region36
      $region35: #{tpu_custom_call.1} parent=5 // pred_region
        // Predicated region
        $region37: #{tpu_custom_call.1} parent=35 // pred_check
          %p284 = pneg %p57
        $region38: #{tpu_custom_call.1} parent=35 // pred_check_branch
          %286 = sbr.rel (%p284) target = $region40
        $region39: #{tpu_custom_call.1} parent=35 // pred_region
          %s287 = sand.u32 %s47, 1
          %s288 = scalar_lea.sflag [#allocation5], %s287
          %s289 = sand.u32 %s47, 1
          %s290 = smul.addr %s289, 32
          %s291 = scalar_lea.vmem [#allocation4], %s290
          %s292 = smul.u32 4, %s31
          %s294 = ssub.s32 512, 512
          %295 = vsyncadd %s288, %s294
          %s296 = smul.addr %s292, 2
          %s297 = sadd.s32 %s30, %s296
          %s298 = smul.addr %s297, 128
          %s299 = scalar_lea.hbm %s0, %s298
          %s300 = sshll.u32 %s291, 4
          %s301 = int_to_ptr.vmem [resolvable:$true] %s300
          %306 = dma.hbm_to_vmem [thread:$0]  %s299, 512, %s301, %s288, 256, 128, 8
        $region40: #{tpu_custom_call.1} parent=35 // pred_fallthru
          _
        // Predicated region
        $region41: #{tpu_custom_call.1} parent=35 // pred_check
          %p307 = pneg %p83
        $region42: #{tpu_custom_call.1} parent=35 // pred_check_branch
          %309 = sbr.rel (%p307) target = $region44
        $region43: #{tpu_custom_call.1} parent=35 // pred_region
          %s310 = sand.u32 %s23, 1
          %s311 = scalar_lea.sflag [#allocation8], %s310
          %s312 = sand.u32 %s73, 1
          %s313 = smul.addr %s312, 8
          %s314 = scalar_lea.vmem [#allocation7], %s313
          %s316 = ssub.s32 128, 128
          %317 = vsyncadd %s311, %s316
          %s318 = smul.addr %s30, 128
          %s319 = scalar_lea.hbm %s1, %s318
          %s321 = sshll.u32 %s314, 4
          %s322 = int_to_ptr.vmem [resolvable:$true] %s321
          %324 = dma.hbm_to_vmem [thread:$0]  %s319, 128, %s322, %s311
        $region44: #{tpu_custom_call.1} parent=35 // pred_fallthru
          _
      $region36: #{tpu_custom_call.1} parent=5 // pred_fallthru
        _
      %p325 = scmp.le.s32.totalorder 1, %s23
      %p326 = scmp.lt.s32.totalorder %s23, 7
      %p327 = pnand %p325, %p326
      %p328 = pneg %p327
      // Predicated region
      $region45: #{tpu_custom_call.1} parent=5 // pred_check
        _
      $region46: #{tpu_custom_call.1} parent=5 // pred_check_branch
        %330 = sbr.rel (%p327) target = $region48
      $region47: #{tpu_custom_call.1} parent=5 // pred_region
        %s331 = ssub.s32 %s23, 1
        %s332 = sand.u32 %s50, 1
        %s333 = scalar_lea.sflag [#allocation5], %s332
        %s334 = sand.u32 %s50, 1
        %s335 = smul.addr %s334, 32
        %s336 = scalar_lea.vmem [#allocation4], %s335
        // Predicated region
        $region49: #{tpu_custom_call.1} parent=47 // pred_check
          %p337 = pneg %p63
        $region50: #{tpu_custom_call.1} parent=47 // pred_check_branch
          %339 = sbr.rel (%p337) target = $region52
        $region51: #{tpu_custom_call.1} parent=47 // pred_region
          %340 = dma.done %s333, 512
        $region52: #{tpu_custom_call.1} parent=47 // pred_fallthru
          _
        %s341 = sand.u32 %s28, 1
        %s342 = scalar_lea.sflag [#allocation8], %s341
        %s343 = sand.u32 %s76, 1
        %s344 = smul.addr %s343, 8
        %s345 = scalar_lea.vmem [#allocation7], %s344
        // Predicated region
        $region53: #{tpu_custom_call.1} parent=47 // pred_check
          %p346 = pneg %p89
        $region54: #{tpu_custom_call.1} parent=47 // pred_check_branch
          %348 = sbr.rel (%p346) target = $region56
        $region55: #{tpu_custom_call.1} parent=47 // pred_region
          %349 = dma.done %s342, 128
        $region56: #{tpu_custom_call.1} parent=47 // pred_fallthru
          _
        // Predicated region
        $region57: #{tpu_custom_call.1} parent=47 // pred_check
          %p350 = pneg %p110
        $region58: #{tpu_custom_call.1} parent=47 // pred_check_branch
          %352 = sbr.rel (%p350) target = $region60
        $region59: #{tpu_custom_call.1} parent=47 // pred_region
          %353 = dma.done [#allocation8], 256
        $region60: #{tpu_custom_call.1} parent=47 // pred_fallthru
          _
        // Predicated region
        $region61: #{tpu_custom_call.1} parent=47 // pred_check
          %p354 = pneg %p131
        $region62: #{tpu_custom_call.1} parent=47 // pred_check_branch
          %356 = sbr.rel (%p354) target = $region64
        $region63: #{tpu_custom_call.1} parent=47 // pred_region
          %357 = dma.done [#allocation11], 2048
        $region64: #{tpu_custom_call.1} parent=47 // pred_fallthru
          _
        // Predicated region
        $region65: #{tpu_custom_call.1} parent=47 // pred_check
          %p358 = pneg %p173
        $region66: #{tpu_custom_call.1} parent=47 // pred_check_branch
          %360 = sbr.rel (%p358) target = $region68
        $region67: #{tpu_custom_call.1} parent=47 // pred_region
          %361 = dma.done [#allocation11], 2048
        $region68: #{tpu_custom_call.1} parent=47 // pred_fallthru
          _
        %s362 = sand.u32 %s50, 1
        %s363 = scalar_lea.sflag [#allocation5], %s362
        %s364 = sand.u32 %s50, 1
        %s365 = smul.addr %s364, 32
        %s366 = scalar_lea.vmem [#allocation4], %s365
        %p367 = pneg %p63
        %p368 = pneg %p60
        %s369 = sand.u32 %s28, 1
        %s370 = scalar_lea.sflag [#allocation8], %s369
        %s371 = sand.u32 %s76, 1
        %s372 = smul.addr %s371, 8
        %s373 = scalar_lea.vmem [#allocation7], %s372
        %p374 = pneg %p89
        %p375 = pneg %p86
        %p376 = pneg %p110
        %p377 = pneg %p107
        %p378 = pneg %p131
        %p379 = pneg %p128
        %p380 = pneg %p152
        %p381 = pneg %p149
        %p382 = pneg %p173
        %p383 = pneg %p170
        %p384 = pneg %p194
        %p385 = pneg %p191
        %p386 = pneg %p220
        %p387 = pneg %p217
        %s388 = sand.u32 %s207, 1
        %s389 = scalar_lea.sflag [#allocation6], %s388
        %s390 = sand.u32 %s207, 1
        %s391 = smul.addr %s390, 8
        %s392 = scalar_lea.vmem [#allocation13], %s391
        %s393 = smul.u32 4, %s33
        %p394 = scmp.eq.s32.totalorder %s33, 0
        // Predicated region
        $region69: #{tpu_custom_call.1} parent=47 // pred_check
          %p395 = pneg %p394
        $region70: #{tpu_custom_call.1} parent=47 // pred_check_branch
          %397 = sbr.rel (%p395) target = $region72
        $region71: #{tpu_custom_call.1} parent=47 // pred_region
          %v398 = vld [vmem:[%s345] sm:$0xff]
          %399 = vst [vmem:[#allocation3] sm:$0xff] %v398
        $region72: #{tpu_custom_call.1} parent=47 // pred_fallthru
          _
        %v400 = vld [vmem:[%s336] sm:$0xff]
        %v401 = vld [vmem:[%s336 + $0x8] sm:$0xff]
        %v402 = vld [vmem:[%s336 + $0x10] sm:$0xff]
        %v403 = vld [vmem:[%s336 + $0x18] sm:$0xff]
        %v404 = vld [vmem:[#allocation9] sm:$0xff]
        %v405 = vld [vmem:[#allocation9 + $0x8] sm:$0xff]
        %v406 = vld [vmem:[%s4] sm:$0x1]
        %v408 = vlaneseq
        %v409 = vshrl.u32 %v408, 7
        %v410 = vsub.s32 0, %v409
        %v411 = vrot.slane %v406, %v410
        %vm413 = vcmask 130048
        %v415 = vsel %vm413, %v400, 0
        %v418 = vsel %vm413, %v401, 0
        %v421 = vsel %vm413, %v402, 0
        %v424 = vsel %vm413, %v403, 0
        %426 = vmatprep.subr.mxu0 0.0
        %427 = vmatpush1.msra.mxu0 0.0
        %428 = vmatprep.subr.mxu0 0.0
        %429 = vmatpush1.msra.mxu0 0.0
        %430 = vmatprep.subr.mxu0 0.0
        %431 = vmatpush1.msra.mxu0 0.0
        %432 = vmatprep.subr.mxu0 0.0
        %433 = vmatpush1.msra.mxu0 0.0
        %434 = vmatprep.subr.mxu0 0.0
        %435 = vmatpush1.msra.mxu0 0.0
        %436 = vmatprep.subr.mxu0 0.0
        %437 = vmatpush1.msra.mxu0 0.0
        %438 = vmatprep.subr.mxu0 0.0
        %439 = vmatpush1.msra.mxu0 0.0
        %440 = vmatprep.subr.mxu0 0.0
        %441 = vmatpush1.msra.mxu0 0.0
        %442 = vmatprep.subr.mxu0 0.0
        %443 = vmatpush1.msra.mxu0 0.0
        %444 = vmatprep.subr.mxu0 0.0
        %445 = vmatpush1.msra.mxu0 0.0
        %446 = vmatprep.subr.mxu0 0.0
        %447 = vmatpush1.msra.mxu0 0.0
        %448 = vmatprep.subr.mxu0 0.0
        %449 = vmatpush1.msra.mxu0 0.0
        %450 = vmatprep.subr.mxu0 0.0
        %451 = vmatpush1.msra.mxu0 0.0
        %452 = vmatprep.subr.mxu0 0.0
        %453 = vmatpush1.msra.mxu0 0.0
        %454 = vmatprep.subr.mxu0 0.0
        %455 = vmatpush1.msra.mxu0 %v405
        %456 = vmatprep.subr.mxu0 0.0
        %457 = vmatpush1.msra.mxu0 %v404
        %458 = vmatprep.subr.mxu0 0.0
        %459 = vmatpush2.msra.mxu0 0.0
        %460 = vmatprep.subr.mxu0 0.0
        %461 = vmatpush2.msra.mxu0 0.0
        %462 = vmatprep.subr.mxu0 0.0
        %463 = vmatpush2.msra.mxu0 0.0
        %464 = vmatprep.subr.mxu0 0.0
        %465 = vmatpush2.msra.mxu0 0.0
        %466 = vmatprep.subr.mxu0 0.0
        %467 = vmatpush2.msra.mxu0 0.0
        %468 = vmatprep.subr.mxu0 0.0
        %469 = vmatpush2.msra.mxu0 0.0
        %470 = vmatprep.subr.mxu0 0.0
        %471 = vmatpush2.msra.mxu0 0.0
        %472 = vmatprep.subr.mxu0 0.0
        %473 = vmatpush2.msra.mxu0 0.0
        %474 = vmatprep.subr.mxu0 0.0
        %475 = vmatpush2.msra.mxu0 0.0
        %476 = vmatprep.subr.mxu0 0.0
        %477 = vmatpush2.msra.mxu0 0.0
        %478 = vmatprep.subr.mxu0 0.0
        %479 = vmatpush2.msra.mxu0 0.0
        %480 = vmatprep.subr.mxu0 0.0
        %481 = vmatpush2.msra.mxu0 0.0
        %482 = vmatprep.subr.mxu0 0.0
        %483 = vmatpush2.msra.mxu0 0.0
        %484 = vmatprep.subr.mxu0 0.0
        %485 = vmatpush2.msra.mxu0 0.0
        %486 = vmatprep.subr.mxu0 0.0
        %487 = vmatpush2.msra.mxu0 0.0
        %488 = vmatprep.subr.mxu0 0.0
        %489 = vmatpush2.msra.mxu0 0.0
        %490 = vmatprep.mubr.f32.mxu0 0.0
        %491 = vmatmul.mubr.f32.gmra.mxu0 %v415
        %v492 = vpop.f32.mrf.mxu0
        %v493 = vadd.f32 %v411, %v492
        %v494 = vpop.f32.mrf.mxu0
        %495 = vmatprep.mubr.f32.mxu0 0.0
        %496 = vmatmul.mubr.f32.gmra.mxu0 %v418
        %v497 = vpop.f32.mrf.mxu0
        %v498 = vadd.f32 %v411, %v497
        %v499 = vpop.f32.mrf.mxu0
        %500 = vmatprep.mubr.f32.mxu0 0.0
        %501 = vmatmul.mubr.f32.gmra.mxu0 %v421
        %v502 = vpop.f32.mrf.mxu0
        %v503 = vadd.f32 %v411, %v502
        %v504 = vpop.f32.mrf.mxu0
        %505 = vmatprep.mubr.f32.mxu0 0.0
        %506 = vmatmul.mubr.f32.gmra.mxu0 %v424
        %v507 = vpop.f32.mrf.mxu0
        %v508 = vadd.f32 %v411, %v507
        %v509 = vpop.f32.mrf.mxu0
        %510 = vdwg.mxu0
        %511 = vst [vmem:[#allocation2] sm:$0xff] %v493
        %512 = vst [vmem:[#allocation2 + $0x8] sm:$0xff] %v498
        %513 = vst [vmem:[#allocation2 + $0x10] sm:$0xff] %v503
        %514 = vst [vmem:[#allocation2 + $0x18] sm:$0xff] %v508
        %v515 = vld [vmem:[#allocation3] sm:$0xff]
        %v516 = vld [vmem:[#allocation10] sm:$0xff]
        %v517 = vld [vmem:[#allocation10 + $0x8] sm:$0xff]
        %v518 = vld [vmem:[#allocation10 + $0x10] sm:$0xff]
        %v519 = vld [vmem:[#allocation10 + $0x18] sm:$0xff]
        %v520 = vld [vmem:[#allocation10 + $0x20] sm:$0xff]
        %v521 = vld [vmem:[#allocation10 + $0x28] sm:$0xff]
        %v522 = vld [vmem:[#allocation10 + $0x30] sm:$0xff]
        %v523 = vld [vmem:[#allocation10 + $0x38] sm:$0xff]
        %v524 = vld [vmem:[#allocation10 + $0x40] sm:$0xff]
        %v525 = vld [vmem:[#allocation10 + $0x48] sm:$0xff]
        %v526 = vld [vmem:[#allocation10 + $0x50] sm:$0xff]
        %v527 = vld [vmem:[#allocation10 + $0x58] sm:$0xff]
        %v528 = vld [vmem:[#allocation10 + $0x60] sm:$0xff]
        %v529 = vld [vmem:[#allocation10 + $0x68] sm:$0xff]
        %v530 = vld [vmem:[#allocation10 + $0x70] sm:$0xff]
        %v531 = vld [vmem:[#allocation10 + $0x78] sm:$0xff]
        %532 = vmatprep.subr.mxu0 0.0
        %533 = vmatpush1.msra.mxu0 %v531
        %534 = vmatprep.subr.mxu0 0.0
        %535 = vmatpush1.msra.mxu0 %v530
        %536 = vmatprep.subr.mxu0 0.0
        %537 = vmatpush1.msra.mxu0 %v529
        %538 = vmatprep.subr.mxu0 0.0
        %539 = vmatpush1.msra.mxu0 %v528
        %540 = vmatprep.subr.mxu0 0.0
        %541 = vmatpush1.msra.mxu0 %v527
        %542 = vmatprep.subr.mxu0 0.0
        %543 = vmatpush1.msra.mxu0 %v526
        %544 = vmatprep.subr.mxu0 0.0
        %545 = vmatpush1.msra.mxu0 %v525
        %546 = vmatprep.subr.mxu0 0.0
        %547 = vmatpush1.msra.mxu0 %v524
        %548 = vmatprep.subr.mxu0 0.0
        %549 = vmatpush1.msra.mxu0 %v523
        %550 = vmatprep.subr.mxu0 0.0
        %551 = vmatpush1.msra.mxu0 %v522
        %552 = vmatprep.subr.mxu0 0.0
        %553 = vmatpush1.msra.mxu0 %v521
        %554 = vmatprep.subr.mxu0 0.0
        %555 = vmatpush1.msra.mxu0 %v520
        %556 = vmatprep.subr.mxu0 0.0
        %557 = vmatpush1.msra.mxu0 %v519
        %558 = vmatprep.subr.mxu0 0.0
        %559 = vmatpush1.msra.mxu0 %v518
        %560 = vmatprep.subr.mxu0 0.0
        %561 = vmatpush1.msra.mxu0 %v517
        %562 = vmatprep.subr.mxu0 0.0
        %563 = vmatpush1.msra.mxu0 %v516
        %564 = vmatprep.subr.mxu0 0.0
        %565 = vmatpush2.msra.mxu0 0.0
        %566 = vmatprep.subr.mxu0 0.0
        %567 = vmatpush2.msra.mxu0 0.0
        %568 = vmatprep.subr.mxu0 0.0
        %569 = vmatpush2.msra.mxu0 0.0
        %570 = vmatprep.subr.mxu0 0.0
        %571 = vmatpush2.msra.mxu0 0.0
        %572 = vmatprep.subr.mxu0 0.0
        %573 = vmatpush2.msra.mxu0 0.0
        %574 = vmatprep.subr.mxu0 0.0
        %575 = vmatpush2.msra.mxu0 0.0
        %576 = vmatprep.subr.mxu0 0.0
        %577 = vmatpush2.msra.mxu0 0.0
        %578 = vmatprep.subr.mxu0 0.0
        %579 = vmatpush2.msra.mxu0 0.0
        %580 = vmatprep.subr.mxu0 0.0
        %581 = vmatpush2.msra.mxu0 0.0
        %582 = vmatprep.subr.mxu0 0.0
        %583 = vmatpush2.msra.mxu0 0.0
        %584 = vmatprep.subr.mxu0 0.0
        %585 = vmatpush2.msra.mxu0 0.0
        %586 = vmatprep.subr.mxu0 0.0
        %587 = vmatpush2.msra.mxu0 0.0
        %588 = vmatprep.subr.mxu0 0.0
        %589 = vmatpush2.msra.mxu0 0.0
        %590 = vmatprep.subr.mxu0 0.0
        %591 = vmatpush2.msra.mxu0 0.0
        %592 = vmatprep.subr.mxu0 0.0
        %593 = vmatpush2.msra.mxu0 0.0
        %594 = vmatprep.subr.mxu0 0.0
        %595 = vmatpush2.msra.mxu0 0.0
        %596 = vmatprep.mubr.f32.mxu0 0.0
        %597 = vmatmul.mubr.f32.gmra.mxu0 %v515
        %v598 = vpop.f32.mrf.mxu0
        %v599 = vadd.f32 0.0, %v598
        %v600 = vpop.f32.mrf.mxu0
        %601 = vdwg.mxu0
        %v602 = vld [vmem:[#allocation2] sm:$0xff]
        %v603 = vadd.f32 %v602, %v599
        %v604 = vtanh.pop %v603
        %s605 = smul.u32 %s33, 4
        %p606 = scmp.lt.s32.totalorder %s605, 10
        %s607 = scalar_select %p606, 1, 0
        %v608 = vstv %s607
        %vm609 = vcmp.eq.s32.totalorder %v608, 1
        %v610 = vsel %vm609, %v604, %v515
        %611 = vst [vmem:[#allocation3] sm:$0xff] %v610
        %v612 = vld [vmem:[#allocation3] sm:$0xff]
        %v613 = vld [vmem:[#allocation10] sm:$0xff]
        %v614 = vld [vmem:[#allocation10 + $0x8] sm:$0xff]
        %v615 = vld [vmem:[#allocation10 + $0x10] sm:$0xff]
        %v616 = vld [vmem:[#allocation10 + $0x18] sm:$0xff]
        %v617 = vld [vmem:[#allocation10 + $0x20] sm:$0xff]
        %v618 = vld [vmem:[#allocation10 + $0x28] sm:$0xff]
        %v619 = vld [vmem:[#allocation10 + $0x30] sm:$0xff]
        %v620 = vld [vmem:[#allocation10 + $0x38] sm:$0xff]
        %v621 = vld [vmem:[#allocation10 + $0x40] sm:$0xff]
        %v622 = vld [vmem:[#allocation10 + $0x48] sm:$0xff]
        %v623 = vld [vmem:[#allocation10 + $0x50] sm:$0xff]
        %v624 = vld [vmem:[#allocation10 + $0x58] sm:$0xff]
        %v625 = vld [vmem:[#allocation10 + $0x60] sm:$0xff]
        %v626 = vld [vmem:[#allocation10 + $0x68] sm:$0xff]
        %v627 = vld [vmem:[#allocation10 + $0x70] sm:$0xff]
        %v628 = vld [vmem:[#allocation10 + $0x78] sm:$0xff]
        %629 = vmatprep.subr.mxu0 0.0
        %630 = vmatpush1.msra.mxu0 %v628
        %631 = vmatprep.subr.mxu0 0.0
        %632 = vmatpush1.msra.mxu0 %v627
        %633 = vmatprep.subr.mxu0 0.0
        %634 = vmatpush1.msra.mxu0 %v626
        %635 = vmatprep.subr.mxu0 0.0
        %636 = vmatpush1.msra.mxu0 %v625
        %637 = vmatprep.subr.mxu0 0.0
        %638 = vmatpush1.msra.mxu0 %v624
        %639 = vmatprep.subr.mxu0 0.0
        %640 = vmatpush1.msra.mxu0 %v623
        %641 = vmatprep.subr.mxu0 0.0
        %642 = vmatpush1.msra.mxu0 %v622
        %643 = vmatprep.subr.mxu0 0.0
        %644 = vmatpush1.msra.mxu0 %v621
        %645 = vmatprep.subr.mxu0 0.0
        %646 = vmatpush1.msra.mxu0 %v620
        %647 = vmatprep.subr.mxu0 0.0
        %648 = vmatpush1.msra.mxu0 %v619
        %649 = vmatprep.subr.mxu0 0.0
        %650 = vmatpush1.msra.mxu0 %v618
        %651 = vmatprep.subr.mxu0 0.0
        %652 = vmatpush1.msra.mxu0 %v617
        %653 = vmatprep.subr.mxu0 0.0
        %654 = vmatpush1.msra.mxu0 %v616
        %655 = vmatprep.subr.mxu0 0.0
        %656 = vmatpush1.msra.mxu0 %v615
        %657 = vmatprep.subr.mxu0 0.0
        %658 = vmatpush1.msra.mxu0 %v614
        %659 = vmatprep.subr.mxu0 0.0
        %660 = vmatpush1.msra.mxu0 %v613
        %661 = vmatprep.subr.mxu0 0.0
        %662 = vmatpush2.msra.mxu0 0.0
        %663 = vmatprep.subr.mxu0 0.0
        %664 = vmatpush2.msra.mxu0 0.0
        %665 = vmatprep.subr.mxu0 0.0
        %666 = vmatpush2.msra.mxu0 0.0
        %667 = vmatprep.subr.mxu0 0.0
        %668 = vmatpush2.msra.mxu0 0.0
        %669 = vmatprep.subr.mxu0 0.0
        %670 = vmatpush2.msra.mxu0 0.0
        %671 = vmatprep.subr.mxu0 0.0
        %672 = vmatpush2.msra.mxu0 0.0
        %673 = vmatprep.subr.mxu0 0.0
        %674 = vmatpush2.msra.mxu0 0.0
        %675 = vmatprep.subr.mxu0 0.0
        %676 = vmatpush2.msra.mxu0 0.0
        %677 = vmatprep.subr.mxu0 0.0
        %678 = vmatpush2.msra.mxu0 0.0
        %679 = vmatprep.subr.mxu0 0.0
        %680 = vmatpush2.msra.mxu0 0.0
        %681 = vmatprep.subr.mxu0 0.0
        %682 = vmatpush2.msra.mxu0 0.0
        %683 = vmatprep.subr.mxu0 0.0
        %684 = vmatpush2.msra.mxu0 0.0
        %685 = vmatprep.subr.mxu0 0.0
        %686 = vmatpush2.msra.mxu0 0.0
        %687 = vmatprep.subr.mxu0 0.0
        %688 = vmatpush2.msra.mxu0 0.0
        %689 = vmatprep.subr.mxu0 0.0
        %690 = vmatpush2.msra.mxu0 0.0
        %691 = vmatprep.subr.mxu0 0.0
        %692 = vmatpush2.msra.mxu0 0.0
        %693 = vmatprep.mubr.f32.mxu0 0.0
        %694 = vmatmul.mubr.f32.gmra.mxu0 %v612
        %v695 = vpop.f32.mrf.mxu0
        %v696 = vadd.f32 0.0, %v695
        %v697 = vpop.f32.mrf.mxu0
        %698 = vdwg.mxu0
        %s699 = scalar_lea.vmem [#allocation2], 8
        %v700 = vld [vmem:[%s699] sm:$0xff]
        %v701 = vadd.f32 %v700, %v696
        %v702 = vtanh.pop %v701
        %s703 = sadd.s32 %s605, 1
        %p704 = scmp.lt.s32.totalorder %s703, 10
        %s705 = scalar_select %p704, 1, 0
        %v706 = vstv %s705
        %vm707 = vcmp.eq.s32.totalorder %v706, 1
        %v708 = vsel %vm707, %v702, %v612
        %709 = vst [vmem:[#allocation3] sm:$0xff] %v708
        %v710 = vld [vmem:[#allocation3] sm:$0xff]
        %v711 = vld [vmem:[#allocation10] sm:$0xff]
        %v712 = vld [vmem:[#allocation10 + $0x8] sm:$0xff]
        %v713 = vld [vmem:[#allocation10 + $0x10] sm:$0xff]
        %v714 = vld [vmem:[#allocation10 + $0x18] sm:$0xff]
        %v715 = vld [vmem:[#allocation10 + $0x20] sm:$0xff]
        %v716 = vld [vmem:[#allocation10 + $0x28] sm:$0xff]
        %v717 = vld [vmem:[#allocation10 + $0x30] sm:$0xff]
        %v718 = vld [vmem:[#allocation10 + $0x38] sm:$0xff]
        %v719 = vld [vmem:[#allocation10 + $0x40] sm:$0xff]
        %v720 = vld [vmem:[#allocation10 + $0x48] sm:$0xff]
        %v721 = vld [vmem:[#allocation10 + $0x50] sm:$0xff]
        %v722 = vld [vmem:[#allocation10 + $0x58] sm:$0xff]
        %v723 = vld [vmem:[#allocation10 + $0x60] sm:$0xff]
        %v724 = vld [vmem:[#allocation10 + $0x68] sm:$0xff]
        %v725 = vld [vmem:[#allocation10 + $0x70] sm:$0xff]
        %v726 = vld [vmem:[#allocation10 + $0x78] sm:$0xff]
        %727 = vmatprep.subr.mxu0 0.0
        %728 = vmatpush1.msra.mxu0 %v726
        %729 = vmatprep.subr.mxu0 0.0
        %730 = vmatpush1.msra.mxu0 %v725
        %731 = vmatprep.subr.mxu0 0.0
        %732 = vmatpush1.msra.mxu0 %v724
        %733 = vmatprep.subr.mxu0 0.0
        %734 = vmatpush1.msra.mxu0 %v723
        %735 = vmatprep.subr.mxu0 0.0
        %736 = vmatpush1.msra.mxu0 %v722
        %737 = vmatprep.subr.mxu0 0.0
        %738 = vmatpush1.msra.mxu0 %v721
        %739 = vmatprep.subr.mxu0 0.0
        %740 = vmatpush1.msra.mxu0 %v720
        %741 = vmatprep.subr.mxu0 0.0
        %742 = vmatpush1.msra.mxu0 %v719
        %743 = vmatprep.subr.mxu0 0.0
        %744 = vmatpush1.msra.mxu0 %v718
        %745 = vmatprep.subr.mxu0 0.0
        %746 = vmatpush1.msra.mxu0 %v717
        %747 = vmatprep.subr.mxu0 0.0
        %748 = vmatpush1.msra.mxu0 %v716
        %749 = vmatprep.subr.mxu0 0.0
        %750 = vmatpush1.msra.mxu0 %v715
        %751 = vmatprep.subr.mxu0 0.0
        %752 = vmatpush1.msra.mxu0 %v714
        %753 = vmatprep.subr.mxu0 0.0
        %754 = vmatpush1.msra.mxu0 %v713
        %755 = vmatprep.subr.mxu0 0.0
        %756 = vmatpush1.msra.mxu0 %v712
        %757 = vmatprep.subr.mxu0 0.0
        %758 = vmatpush1.msra.mxu0 %v711
        %759 = vmatprep.subr.mxu0 0.0
        %760 = vmatpush2.msra.mxu0 0.0
        %761 = vmatprep.subr.mxu0 0.0
        %762 = vmatpush2.msra.mxu0 0.0
        %763 = vmatprep.subr.mxu0 0.0
        %764 = vmatpush2.msra.mxu0 0.0
        %765 = vmatprep.subr.mxu0 0.0
        %766 = vmatpush2.msra.mxu0 0.0
        %767 = vmatprep.subr.mxu0 0.0
        %768 = vmatpush2.msra.mxu0 0.0
        %769 = vmatprep.subr.mxu0 0.0
        %770 = vmatpush2.msra.mxu0 0.0
        %771 = vmatprep.subr.mxu0 0.0
        %772 = vmatpush2.msra.mxu0 0.0
        %773 = vmatprep.subr.mxu0 0.0
        %774 = vmatpush2.msra.mxu0 0.0
        %775 = vmatprep.subr.mxu0 0.0
        %776 = vmatpush2.msra.mxu0 0.0
        %777 = vmatprep.subr.mxu0 0.0
        %778 = vmatpush2.msra.mxu0 0.0
        %779 = vmatprep.subr.mxu0 0.0
        %780 = vmatpush2.msra.mxu0 0.0
        %781 = vmatprep.subr.mxu0 0.0
        %782 = vmatpush2.msra.mxu0 0.0
        %783 = vmatprep.subr.mxu0 0.0
        %784 = vmatpush2.msra.mxu0 0.0
        %785 = vmatprep.subr.mxu0 0.0
        %786 = vmatpush2.msra.mxu0 0.0
        %787 = vmatprep.subr.mxu0 0.0
        %788 = vmatpush2.msra.mxu0 0.0
        %789 = vmatprep.subr.mxu0 0.0
        %790 = vmatpush2.msra.mxu0 0.0
        %791 = vmatprep.mubr.f32.mxu0 0.0
        %792 = vmatmul.mubr.f32.gmra.mxu0 %v710
        %v793 = vpop.f32.mrf.mxu0
        %v794 = vadd.f32 0.0, %v793
        %v795 = vpop.f32.mrf.mxu0
        %796 = vdwg.mxu0
        %s797 = scalar_lea.vmem [#allocation2], 16
        %v798 = vld [vmem:[%s797] sm:$0xff]
        %v799 = vadd.f32 %v798, %v794
        %v800 = vtanh.pop %v799
        %s801 = sadd.s32 %s605, 2
        %p802 = scmp.lt.s32.totalorder %s801, 10
        %s803 = scalar_select %p802, 1, 0
        %v804 = vstv %s803
        %vm805 = vcmp.eq.s32.totalorder %v804, 1
        %v806 = vsel %vm805, %v800, %v710
        %807 = vst [vmem:[#allocation3] sm:$0xff] %v806
        %v808 = vld [vmem:[#allocation3] sm:$0xff]
        %v809 = vld [vmem:[#allocation10] sm:$0xff]
        %v810 = vld [vmem:[#allocation10 + $0x8] sm:$0xff]
        %v811 = vld [vmem:[#allocation10 + $0x10] sm:$0xff]
        %v812 = vld [vmem:[#allocation10 + $0x18] sm:$0xff]
        %v813 = vld [vmem:[#allocation10 + $0x20] sm:$0xff]
        %v814 = vld [vmem:[#allocation10 + $0x28] sm:$0xff]
        %v815 = vld [vmem:[#allocation10 + $0x30] sm:$0xff]
        %v816 = vld [vmem:[#allocation10 + $0x38] sm:$0xff]
        %v817 = vld [vmem:[#allocation10 + $0x40] sm:$0xff]
        %v818 = vld [vmem:[#allocation10 + $0x48] sm:$0xff]
        %v819 = vld [vmem:[#allocation10 + $0x50] sm:$0xff]
        %v820 = vld [vmem:[#allocation10 + $0x58] sm:$0xff]
        %v821 = vld [vmem:[#allocation10 + $0x60] sm:$0xff]
        %v822 = vld [vmem:[#allocation10 + $0x68] sm:$0xff]
        %v823 = vld [vmem:[#allocation10 + $0x70] sm:$0xff]
        %v824 = vld [vmem:[#allocation10 + $0x78] sm:$0xff]
        %825 = vmatprep.subr.mxu0 0.0
        %826 = vmatpush1.msra.mxu0 %v824
        %827 = vmatprep.subr.mxu0 0.0
        %828 = vmatpush1.msra.mxu0 %v823
        %829 = vmatprep.subr.mxu0 0.0
        %830 = vmatpush1.msra.mxu0 %v822
        %831 = vmatprep.subr.mxu0 0.0
        %832 = vmatpush1.msra.mxu0 %v821
        %833 = vmatprep.subr.mxu0 0.0
        %834 = vmatpush1.msra.mxu0 %v820
        %835 = vmatprep.subr.mxu0 0.0
        %836 = vmatpush1.msra.mxu0 %v819
        %837 = vmatprep.subr.mxu0 0.0
        %838 = vmatpush1.msra.mxu0 %v818
        %839 = vmatprep.subr.mxu0 0.0
        %840 = vmatpush1.msra.mxu0 %v817
        %841 = vmatprep.subr.mxu0 0.0
        %842 = vmatpush1.msra.mxu0 %v816
        %843 = vmatprep.subr.mxu0 0.0
        %844 = vmatpush1.msra.mxu0 %v815
        %845 = vmatprep.subr.mxu0 0.0
        %846 = vmatpush1.msra.mxu0 %v814
        %847 = vmatprep.subr.mxu0 0.0
        %848 = vmatpush1.msra.mxu0 %v813
        %849 = vmatprep.subr.mxu0 0.0
        %850 = vmatpush1.msra.mxu0 %v812
        %851 = vmatprep.subr.mxu0 0.0
        %852 = vmatpush1.msra.mxu0 %v811
        %853 = vmatprep.subr.mxu0 0.0
        %854 = vmatpush1.msra.mxu0 %v810
        %855 = vmatprep.subr.mxu0 0.0
        %856 = vmatpush1.msra.mxu0 %v809
        %857 = vmatprep.subr.mxu0 0.0
        %858 = vmatpush2.msra.mxu0 0.0
        %859 = vmatprep.subr.mxu0 0.0
        %860 = vmatpush2.msra.mxu0 0.0
        %861 = vmatprep.subr.mxu0 0.0
        %862 = vmatpush2.msra.mxu0 0.0
        %863 = vmatprep.subr.mxu0 0.0
        %864 = vmatpush2.msra.mxu0 0.0
        %865 = vmatprep.subr.mxu0 0.0
        %866 = vmatpush2.msra.mxu0 0.0
        %867 = vmatprep.subr.mxu0 0.0
        %868 = vmatpush2.msra.mxu0 0.0
        %869 = vmatprep.subr.mxu0 0.0
        %870 = vmatpush2.msra.mxu0 0.0
        %871 = vmatprep.subr.mxu0 0.0
        %872 = vmatpush2.msra.mxu0 0.0
        %873 = vmatprep.subr.mxu0 0.0
        %874 = vmatpush2.msra.mxu0 0.0
        %875 = vmatprep.subr.mxu0 0.0
        %876 = vmatpush2.msra.mxu0 0.0
        %877 = vmatprep.subr.mxu0 0.0
        %878 = vmatpush2.msra.mxu0 0.0
        %879 = vmatprep.subr.mxu0 0.0
        %880 = vmatpush2.msra.mxu0 0.0
        %881 = vmatprep.subr.mxu0 0.0
        %882 = vmatpush2.msra.mxu0 0.0
        %883 = vmatprep.subr.mxu0 0.0
        %884 = vmatpush2.msra.mxu0 0.0
        %885 = vmatprep.subr.mxu0 0.0
        %886 = vmatpush2.msra.mxu0 0.0
        %887 = vmatprep.subr.mxu0 0.0
        %888 = vmatpush2.msra.mxu0 0.0
        %889 = vmatprep.mubr.f32.mxu0 0.0
        %890 = vmatmul.mubr.f32.gmra.mxu0 %v808
        %v891 = vpop.f32.mrf.mxu0
        %v892 = vadd.f32 0.0, %v891
        %v893 = vpop.f32.mrf.mxu0
        %894 = vdwg.mxu0
        %s895 = scalar_lea.vmem [#allocation2], 24
        %v896 = vld [vmem:[%s895] sm:$0xff]
        %v897 = vadd.f32 %v896, %v892
        %v898 = vtanh.pop %v897
        %s899 = sadd.s32 %s605, 3
        %p900 = scmp.lt.s32.totalorder %s899, 10
        %s901 = scalar_select %p900, 1, 0
        %v902 = vstv %s901
        %vm903 = vcmp.eq.s32.totalorder %v902, 1
        %v904 = vsel %vm903, %v898, %v808
        %905 = vst [vmem:[#allocation3] sm:$0xff] %v904
        %p906 = scmp.eq.s32.totalorder %s33, 2
        // Predicated region
        $region73: #{tpu_custom_call.1} parent=47 // pred_check
          %p907 = pneg %p906
        $region74: #{tpu_custom_call.1} parent=47 // pred_check_branch
          %909 = sbr.rel (%p907) target = $region76
        $region75: #{tpu_custom_call.1} parent=47 // pred_region
          %v910 = vld [vmem:[#allocation3] sm:$0xff]
          %v911 = vld [vmem:[#allocation12] sm:$0xff]
          %v912 = vld [vmem:[#allocation12 + $0x8] sm:$0xff]
          %v913 = vld [vmem:[#allocation12 + $0x10] sm:$0xff]
          %v914 = vld [vmem:[#allocation12 + $0x18] sm:$0xff]
          %v915 = vld [vmem:[#allocation12 + $0x20] sm:$0xff]
          %v916 = vld [vmem:[#allocation12 + $0x28] sm:$0xff]
          %v917 = vld [vmem:[#allocation12 + $0x30] sm:$0xff]
          %v918 = vld [vmem:[#allocation12 + $0x38] sm:$0xff]
          %v919 = vld [vmem:[#allocation12 + $0x40] sm:$0xff]
          %v920 = vld [vmem:[#allocation12 + $0x48] sm:$0xff]
          %v921 = vld [vmem:[#allocation12 + $0x50] sm:$0xff]
          %v922 = vld [vmem:[#allocation12 + $0x58] sm:$0xff]
          %v923 = vld [vmem:[#allocation12 + $0x60] sm:$0xff]
          %v924 = vld [vmem:[#allocation12 + $0x68] sm:$0xff]
          %v925 = vld [vmem:[#allocation12 + $0x70] sm:$0xff]
          %v926 = vld [vmem:[#allocation12 + $0x78] sm:$0xff]
          %v927 = vld [vmem:[%s6] sm:$0x1]
          %v929 = vlaneseq
          %v930 = vshrl.u32 %v929, 7
          %v931 = vsub.s32 0, %v930
          %v932 = vrot.slane %v927, %v931
          %934 = vmatprep.subr.mxu0 0.0
          %935 = vmatpush1.msra.mxu0 %v926
          %936 = vmatprep.subr.mxu0 0.0
          %937 = vmatpush1.msra.mxu0 %v925
          %938 = vmatprep.subr.mxu0 0.0
          %939 = vmatpush1.msra.mxu0 %v924
          %940 = vmatprep.subr.mxu0 0.0
          %941 = vmatpush1.msra.mxu0 %v923
          %942 = vmatprep.subr.mxu0 0.0
          %943 = vmatpush1.msra.mxu0 %v922
          %944 = vmatprep.subr.mxu0 0.0
          %945 = vmatpush1.msra.mxu0 %v921
          %946 = vmatprep.subr.mxu0 0.0
          %947 = vmatpush1.msra.mxu0 %v920
          %948 = vmatprep.subr.mxu0 0.0
          %949 = vmatpush1.msra.mxu0 %v919
          %950 = vmatprep.subr.mxu0 0.0
          %951 = vmatpush1.msra.mxu0 %v918
          %952 = vmatprep.subr.mxu0 0.0
          %953 = vmatpush1.msra.mxu0 %v917
          %954 = vmatprep.subr.mxu0 0.0
          %955 = vmatpush1.msra.mxu0 %v916
          %956 = vmatprep.subr.mxu0 0.0
          %957 = vmatpush1.msra.mxu0 %v915
          %958 = vmatprep.subr.mxu0 0.0
          %959 = vmatpush1.msra.mxu0 %v914
          %960 = vmatprep.subr.mxu0 0.0
          %961 = vmatpush1.msra.mxu0 %v913
          %962 = vmatprep.subr.mxu0 0.0
          %963 = vmatpush1.msra.mxu0 %v912
          %964 = vmatprep.subr.mxu0 0.0
          %965 = vmatpush1.msra.mxu0 %v911
          %966 = vmatprep.subr.mxu0 0.0
          %967 = vmatpush2.msra.mxu0 0.0
          %968 = vmatprep.subr.mxu0 0.0
          %969 = vmatpush2.msra.mxu0 0.0
          %970 = vmatprep.subr.mxu0 0.0
          %971 = vmatpush2.msra.mxu0 0.0
          %972 = vmatprep.subr.mxu0 0.0
          %973 = vmatpush2.msra.mxu0 0.0
          %974 = vmatprep.subr.mxu0 0.0
          %975 = vmatpush2.msra.mxu0 0.0
          %976 = vmatprep.subr.mxu0 0.0
          %977 = vmatpush2.msra.mxu0 0.0
          %978 = vmatprep.subr.mxu0 0.0
          %979 = vmatpush2.msra.mxu0 0.0
          %980 = vmatprep.subr.mxu0 0.0
          %981 = vmatpush2.msra.mxu0 0.0
          %982 = vmatprep.subr.mxu0 0.0
          %983 = vmatpush2.msra.mxu0 0.0
          %984 = vmatprep.subr.mxu0 0.0
          %985 = vmatpush2.msra.mxu0 0.0
          %986 = vmatprep.subr.mxu0 0.0
          %987 = vmatpush2.msra.mxu0 0.0
          %988 = vmatprep.subr.mxu0 0.0
          %989 = vmatpush2.msra.mxu0 0.0
          %990 = vmatprep.subr.mxu0 0.0
          %991 = vmatpush2.msra.mxu0 0.0
          %992 = vmatprep.subr.mxu0 0.0
          %993 = vmatpush2.msra.mxu0 0.0
          %994 = vmatprep.subr.mxu0 0.0
          %995 = vmatpush2.msra.mxu0 0.0
          %996 = vmatprep.subr.mxu0 0.0
          %997 = vmatpush2.msra.mxu0 0.0
          %998 = vmatprep.mubr.f32.mxu0 0.0
          %999 = vmatmul.mubr.f32.gmra.mxu0 %v910
          %v1000 = vpop.f32.mrf.mxu0
          %v1001 = vadd.f32 %v932, %v1000
          %v1002 = vpop.f32.mrf.mxu0
          %1003 = vdwg.mxu0
          %1004 = vst [vmem:[%s392] sm:$0xff] %v1001
        $region76: #{tpu_custom_call.1} parent=47 // pred_fallthru
          _
        %s1005 = sand.u32 %s207, 1
        %s1006 = scalar_lea.sflag [#allocation6], %s1005
        %s1007 = sand.u32 %s207, 1
        %s1008 = smul.addr %s1007, 8
        %s1009 = scalar_lea.vmem [#allocation13], %s1008
        // Predicated region
        $region77: #{tpu_custom_call.1} parent=47 // pred_check
          %p1010 = pneg %p217
        $region78: #{tpu_custom_call.1} parent=47 // pred_check_branch
          %1012 = sbr.rel (%p1010) target = $region80
        $region79: #{tpu_custom_call.1} parent=47 // pred_region
          %s1014 = ssub.s32 128, 128
          %1015 = vsyncadd %s1006, %s1014
          %s1016 = smul.addr %s32, 128
          %s1017 = scalar_lea.hbm %s7, %s1016
          %s1019 = sshll.u32 %s1009, 4
          %s1020 = int_to_ptr.vmem [resolvable:$true] %s1019
          %1022 = dma.vmem_to_hbm [thread:$0]  %s1020, 128, %s1017, %s1006
        $region80: #{tpu_custom_call.1} parent=47 // pred_fallthru
          _
      $region48: #{tpu_custom_call.1} parent=5 // pred_fallthru
        _
      %p1023 = scmp.le.s32.totalorder 2, %s23
      // Predicated region
      $region81: #{tpu_custom_call.1} parent=5 // pred_check
        %p1024 = pneg %p1023
      $region82: #{tpu_custom_call.1} parent=5 // pred_check_branch
        %1026 = sbr.rel (%p1024) target = $region84
      $region83: #{tpu_custom_call.1} parent=5 // pred_region
        %s1027 = ssub.s32 %s23, 2
        // Predicated region
        $region85: #{tpu_custom_call.1} parent=83 // pred_check
          %p1028 = pneg %p223
        $region86: #{tpu_custom_call.1} parent=83 // pred_check_branch
          %1030 = sbr.rel (%p1028) target = $region88
        $region87: #{tpu_custom_call.1} parent=83 // pred_region
          %s1031 = sand.u32 %s208, 1
          %s1032 = scalar_lea.sflag [#allocation6], %s1031
          %s1033 = sand.u32 %s208, 1
          %s1034 = smul.addr %s1033, 8
          %s1035 = scalar_lea.vmem [#allocation13], %s1034
          %1036 = dma.done %s1032, 128
        $region88: #{tpu_custom_call.1} parent=83 // pred_fallthru
          _
      $region84: #{tpu_custom_call.1} parent=5 // pred_fallthru
        _
    $region6: #{tpu_custom_call.1} parent=1 // loop_footer
      %s27 = sadd.s32 1, %s23
    $region7: #{tpu_custom_call.1} parent=1 // loop_footer_branch
      %22 = sbr.rel target = $region3
    $region8: #{tpu_custom_call.1} parent=1 // loop_exit
      _
    %1037 = vsyncpa [#allocation5], 1
    %s1038 = scalar_lea.sflag [#allocation5], 1
    %1039 = vsyncpa %s1038, 1
    %1040 = vsyncpa [#allocation8], 1
    %s1041 = scalar_lea.sflag [#allocation8], 1
    %1042 = vsyncpa %s1041, 1
    %1043 = vsyncpa [#allocation11], 1
    %1044 = vsyncpa [#allocation6], 1
    %s1045 = scalar_lea.sflag [#allocation6], 1
    %1046 = vsyncpa %s1045, 1

</llo_original>
